<compile_context>
chip_gen: v6e
topology: v6e:2x2x1
jax: 0.10.0
libtpu: 0.0.40
codegen_flags: <defaults>
</compile_context>

<pallas_src>
import jax
import jax.numpy as jnp
from jax import lax
from jax.experimental import pallas as pl
from jax.experimental.pallas import tpu as pltpu


def _round_up(x, m):
    return ((x + m - 1) // m) * m


def dummy_gpt_kernel(idx_ref, tok_hbm, pos_ref, w_ref, b_ref, out_ref,
                     x_sc, sem):
    """Grid = (M-tiles, V-tiles).

    idx_ref : SMEM [M_pad]      int32   flattened, clamped token ids (prefetch)
    tok_hbm : HBM  [V, E]       param   token embedding table (pl.ANY, no auto-DMA)
    pos_ref : VMEM [tm, E]      param   positional rows for this M-tile
    w_ref   : VMEM [E, tn]      param   out_head weight tile (pre-transposed)
    b_ref   : VMEM [1, tn]      f32     out_head bias tile
    out_ref : VMEM [tm, tn]     f32     logits tile
    x_sc    : VMEM [tm, E]      param   gathered activations (reused across V-tiles)
    sem     : DMA semaphore (1,)
    """
    m = pl.program_id(0)
    n = pl.program_id(1)
    tm = x_sc.shape[0]

    # Gather the tm token-embedding rows from HBM once per M-tile (n == 0),
    # add positional embeddings, and keep the result resident in VMEM scratch
    # for all subsequent V-tiles of this M-tile.
    @pl.when(n == 0)
    def _():
        base = m * tm

        def start_row(r, carry):
            tok_id = idx_ref[base + r]                     # scalar from SMEM
            pltpu.make_async_copy(
                tok_hbm.at[pl.ds(tok_id, 1)],              # (1, E) row in HBM
                x_sc.at[pl.ds(r, 1)],                      # (1, E) row in VMEM
                sem.at[0],
            ).start()
            return carry

        lax.fori_loop(0, tm, start_row, 0)

        def wait_row(r, carry):
            # Descriptor only supplies the transfer size; all copies share sem.
            pltpu.make_async_copy(
                tok_hbm.at[pl.ds(0, 1)],
                x_sc.at[pl.ds(0, 1)],
                sem.at[0],
            ).wait()
            return carry

        lax.fori_loop(0, tm, wait_row, 0)

        # TODO(synk): drop_emb treated as identity (inference semantics);
        # DummyTransformerBlock / DummyLayerNorm are identity by definition.
        x_sc[...] = x_sc[...] + pos_ref[...]

    # Fused output head for this (M-tile, V-tile): (tm, E) @ (E, tn) on MXU.
    logits = jnp.dot(x_sc[...], w_ref[...],
                     preferred_element_type=jnp.float32)
    out_ref[...] = (logits + b_ref[...]).astype(out_ref.dtype)


def dummy_gpt_forward(in_idx, tok_emb, pos_emb, w_out_t, b_out, *,
                      block_m=128, block_n=512, param_dtype=jnp.float32):
    """DummyGPTModel forward.

    in_idx  : [B, T] int    token ids
    tok_emb : [V, E]        token embedding table
    pos_emb : [C, E]        positional embedding table
    w_out_t : [E, V]        out_head weight, stored pre-transposed (one-time
                            layout transform of torch's [V, E] weight)
    b_out   : [V]           out_head bias
    Returns [B, T, V] float32 logits.

    param_dtype=jnp.bfloat16 halves weight/embedding HBM+VMEM traffic on
    v6e/v7x (matmul still accumulates in f32).
    """
    B, T = in_idx.shape
    V, E = tok_emb.shape
    C = pos_emb.shape[0]
    assert T <= C, "seq_len must not exceed context_length"
    assert w_out_t.shape == (E, V)

    M = B * T
    tm = min(block_m, _round_up(M, 8))
    M_pad = _round_up(M, tm)
    tn = min(block_n, _round_up(V, 128))
    V_pad = _round_up(V, tn)

    # Flatten + clamp token ids (keeps HBM DMA addresses in-bounds even for
    # untrusted ids); pad rows with id 0 (padded rows are sliced off below).
    ids = jnp.clip(in_idx.reshape(-1).astype(jnp.int32), 0, V - 1)
    ids = jnp.pad(ids, (0, M_pad - M))

    # Positional rows for every flattened (b, t) row — tiny (M, E) broadcast
    # done once per call (layout plumbing; the add still happens in-kernel).
    pos_rows = jnp.tile(pos_emb[:T].astype(param_dtype), (B, 1))
    pos_rows = jnp.pad(pos_rows, ((0, M_pad - M), (0, 0)))

    tok = tok_emb.astype(param_dtype)
    w = jnp.pad(w_out_t.astype(param_dtype), ((0, 0), (0, V_pad - V)))
    b = jnp.pad(b_out.astype(jnp.float32), (0, V_pad - V)).reshape(1, V_pad)

    grid = (M_pad // tm, V_pad // tn)

    grid_spec = pltpu.PrefetchScalarGridSpec(
        num_scalar_prefetch=1,                    # token ids -> SMEM
        grid=grid,
        in_specs=[
            pl.BlockSpec(memory_space=pl.ANY),                  # tok_emb in HBM
            pl.BlockSpec((tm, E), lambda m, n, ids: (m, 0)),    # pos rows
            pl.BlockSpec((E, tn), lambda m, n, ids: (0, n)),    # W^T tile
            pl.BlockSpec((1, tn), lambda m, n, ids: (0, n)),    # bias tile
        ],
        out_specs=pl.BlockSpec((tm, tn), lambda m, n, ids: (m, n)),
        scratch_shapes=[
            pltpu.VMEM((tm, E), param_dtype),     # gathered activations
            pltpu.SemaphoreType.DMA((1,)),        # shared gather semaphore
        ],
    )

    out = pl.pallas_call(
        dummy_gpt_kernel,
        out_shape=jax.ShapeDtypeStruct((M_pad, V_pad), jnp.float32),
        grid_spec=grid_spec,
        compiler_params=pltpu.CompilerParams(
            # M-tiles are independent (megacore-shardable on v7x); the V axis
            # must be sequential per M-tile because the gather scratch is
            # filled at n == 0 and reused for n > 0.
            dimension_semantics=("parallel", "arbitrary")),
    )(ids, tok, pos_rows, w, b)

    return out[:M, :V].reshape(B, T, V)


if __name__ == "__main__":
    # Small GPT config consistent with the module's __init__.
    cfg = dict(
        vocab_size=512,
        context_length=16,
        emb_dim=32,
        n_layers=2,        # DummyTransformerBlocks are identity
        drop_rate=0.1,     # identity at inference
    )
    B, T = 2, 8

    key = jax.random.PRNGKey(0)
    k_idx, k_tok, k_pos, k_w, k_b = jax.random.split(key, 5)

    in_idx = jax.random.randint(k_idx, (B, T), 0, cfg["vocab_size"],
                                dtype=jnp.int32)
    tok_emb = jax.random.normal(k_tok, (cfg["vocab_size"], cfg["emb_dim"]),
                                dtype=jnp.float32)
    pos_emb = jax.random.normal(k_pos, (cfg["context_length"], cfg["emb_dim"]),
                                dtype=jnp.float32)
    # nn.Linear(emb_dim, vocab_size): weight [V, E], bias [V].
    bound = 1.0 / (cfg["emb_dim"] ** 0.5)
    w_out = jax.random.uniform(k_w, (cfg["vocab_size"], cfg["emb_dim"]),
                               minval=-bound, maxval=bound, dtype=jnp.float32)
    b_out = jax.random.uniform(k_b, (cfg["vocab_size"],),
                               minval=-bound, maxval=bound, dtype=jnp.float32)

    # One-time parameter-layout transform (not a per-forward transpose):
    # store the out_head weight as [E, V] so the kernel streams it directly.
    w_out_t = jnp.asarray(w_out, jnp.float32).T

    # Small block sizes here purely to exercise the (M-tile, V-tile) grid and
    # the gather-reuse path on demo shapes; defaults (128, 512) are the
    # production tile sizes.
    logits = dummy_gpt_forward(in_idx, tok_emb, pos_emb, w_out_t, b_out,
                               block_m=8, block_n=128)
    logits = jax.block_until_ready(logits)

    # Pure-JAX reference check.
    x_ref = tok_emb[in_idx] + pos_emb[:T][None]
    ref = x_ref @ w_out.T + b_out
    assert logits.shape == (B, T, cfg["vocab_size"])
    assert jnp.allclose(logits, ref, rtol=2e-3, atol=2e-3), "mismatch vs ref"

    print("KERNEL_OK")
</pallas_src>

<mosaic_0001>
module attributes {stable_mosaic.version = 11 : i64} {
  func.func @dummy_gpt_kernel(%arg0: i32, %arg1: i32, %arg2: memref<16xi32, #tpu.memory_space<smem>>, %arg3: memref<512x32xf32, #tpu.memory_space<any>>, %arg4: memref<8x32xf32, #tpu.memory_space<vmem>>, %arg5: memref<32x128xf32, #tpu.memory_space<vmem>>, %arg6: memref<1x128xf32, #tpu.memory_space<vmem>>, %arg7: memref<8x128xf32, #tpu.memory_space<vmem>>, %arg8: memref<8x32xf32, #tpu.memory_space<vmem>>, %arg9: memref<1x!tpu.dma_semaphore, #tpu.memory_space<semaphore_mem>>) attributes {dimension_semantics = [#tpu.dimension_semantics<parallel>, #tpu.dimension_semantics<arbitrary>], iteration_bounds = array<i64: 2, 4>, scalar_prefetch = 1 : i64, scratch_operands = 2 : i64, tpu.core_type = #tpu.core_type<tc>, window_params = [{}, {transform_indices = @transform_1, window_bounds = array<i64: 8, 32>}, {transform_indices = @transform_2, window_bounds = array<i64: 32, 128>}, {transform_indices = @transform_3, window_bounds = array<i64: 1, 128>}, {transform_indices = @transform_4, window_bounds = array<i64: 8, 128>}]} {
    %c0_i32 = arith.constant 0 : i32
    %0 = arith.cmpi eq, %arg1, %c0_i32 : i32
    %1 = arith.extui %0 : i1 to i32
    %c0_i32_0 = arith.constant 0 : i32
    %2 = arith.cmpi ne, %1, %c0_i32_0 : i32
    scf.if %2 {
      %c8_i32 = arith.constant 8 : i32
      %10 = arith.muli %arg0, %c8_i32 : i32
      %c0_i32_8 = arith.constant 0 : i32
      %c8_i32_9 = arith.constant 8 : i32
      %11 = arith.addi %c0_i32_8, %c8_i32_9 : i32
      %c1_i32 = arith.constant 1 : i32
      scf.for %arg10 = %c0_i32_8 to %11 step %c1_i32  : i32 {
        %17 = arith.addi %10, %arg10 : i32
        %18 = arith.index_cast %17 : i32 to index
        %19 = memref.load %arg2[%18] : memref<16xi32, #tpu.memory_space<smem>>
        %c0_i32_20 = arith.constant 0 : i32
        %c0_i32_21 = arith.constant 0 : i32
        %20 = tpu.memref_slice %arg3[%19, %c0_i32_21] : memref<512x32xf32, #tpu.memory_space<any>> -> memref<1x32xf32, #tpu.memory_space<any>>
        %c0_i32_22 = arith.constant 0 : i32
        %21 = tpu.memref_slice %arg8[%arg10, %c0_i32_22] : memref<8x32xf32, #tpu.memory_space<vmem>> -> memref<1x32xf32, #tpu.memory_space<vmem>>
        %22 = tpu.memref_slice %arg9[%c0_i32_20] : memref<1x!tpu.dma_semaphore, #tpu.memory_space<semaphore_mem>> -> memref<1x!tpu.dma_semaphore, #tpu.memory_space<semaphore_mem>>
        %23 = tpu.memref_squeeze %22 : memref<1x!tpu.dma_semaphore, #tpu.memory_space<semaphore_mem>> -> memref<!tpu.dma_semaphore, #tpu.memory_space<semaphore_mem>>
        tpu.enqueue_dma source(%20 : memref<1x32xf32, #tpu.memory_space<any>>) target(%21 : memref<1x32xf32, #tpu.memory_space<vmem>>) target_semaphore(%23 : memref<!tpu.dma_semaphore, #tpu.memory_space<semaphore_mem>>)
      }
      %c8_i32_10 = arith.constant 8 : i32
      %c0_i32_11 = arith.constant 0 : i32
      %c8_i32_12 = arith.constant 8 : i32
      %12 = arith.addi %c0_i32_11, %c8_i32_12 : i32
      %c1_i32_13 = arith.constant 1 : i32
      scf.for %arg10 = %c0_i32_11 to %12 step %c1_i32_13  : i32 {
        %c0_i32_20 = arith.constant 0 : i32
        %c0_i32_21 = arith.constant 0 : i32
        %c0_i32_22 = arith.constant 0 : i32
        %17 = tpu.memref_slice %arg3[%c0_i32_21, %c0_i32_22] : memref<512x32xf32, #tpu.memory_space<any>> -> memref<1x32xf32, #tpu.memory_space<any>>
        %c0_i32_23 = arith.constant 0 : i32
        %c0_i32_24 = arith.constant 0 : i32
        %18 = tpu.memref_slice %arg8[%c0_i32_23, %c0_i32_24] : memref<8x32xf32, #tpu.memory_space<vmem>> -> memref<1x32xf32, #tpu.memory_space<vmem>>
        %19 = tpu.memref_slice %arg9[%c0_i32_20] : memref<1x!tpu.dma_semaphore, #tpu.memory_space<semaphore_mem>> -> memref<1x!tpu.dma_semaphore, #tpu.memory_space<semaphore_mem>>
        %20 = tpu.memref_squeeze %19 : memref<1x!tpu.dma_semaphore, #tpu.memory_space<semaphore_mem>> -> memref<!tpu.dma_semaphore, #tpu.memory_space<semaphore_mem>>
        tpu.wait_dma2 semaphore(%20 : memref<!tpu.dma_semaphore, #tpu.memory_space<semaphore_mem>>) src(%17 : memref<1x32xf32, #tpu.memory_space<any>>) dst(%18 : memref<1x32xf32, #tpu.memory_space<vmem>>)
      }
      %c0_14 = arith.constant 0 : index
      %c0_15 = arith.constant 0 : index
      %13 = vector.load %arg8[%c0_14, %c0_15] : memref<8x32xf32, #tpu.memory_space<vmem>>, vector<8x32xf32>
      %c0_16 = arith.constant 0 : index
      %c0_17 = arith.constant 0 : index
      %14 = vector.load %arg4[%c0_16, %c0_17] : memref<8x32xf32, #tpu.memory_space<vmem>>, vector<8x32xf32>
      %15 = arith.addf %13, %14 : vector<8x32xf32>
      %c0_18 = arith.constant 0 : index
      %c0_19 = arith.constant 0 : index
      %16 = vector.load %arg8[%c0_18, %c0_19] : memref<8x32xf32, #tpu.memory_space<vmem>>, vector<8x32xf32>
      tpu.vector_store %arg8[%c0_18, %c0_19], %15 {strides = array<i32>} : memref<8x32xf32, #tpu.memory_space<vmem>>, vector<8x32xf32>,
    } else {
    }
    %c0 = arith.constant 0 : index
    %c0_1 = arith.constant 0 : index
    %3 = vector.load %arg8[%c0, %c0_1] : memref<8x32xf32, #tpu.memory_space<vmem>>, vector<8x32xf32>
    %c0_2 = arith.constant 0 : index
    %c0_3 = arith.constant 0 : index
    %4 = vector.load %arg5[%c0_2, %c0_3] : memref<32x128xf32, #tpu.memory_space<vmem>>, vector<32x128xf32>
    %cst = arith.constant dense<0.000000e+00> : vector<8x128xf32>
    %5 = tpu.matmul %3, %4, %cst {dimension_numbers = #tpu.dot_dimension_numbers<[1], [0], [0], [1], [0, 0, 1, 1], [], []>} : vector<8x32xf32>, vector<32x128xf32>, vector<8x128xf32> -> vector<8x128xf32>
    %c0_4 = arith.constant 0 : index
    %c0_5 = arith.constant 0 : index
    %6 = vector.load %arg6[%c0_4, %c0_5] : memref<1x128xf32, #tpu.memory_space<vmem>>, vector<1x128xf32>
    %7 = vector.broadcast %6 : vector<1x128xf32> to vector<8x128xf32>
    %8 = arith.addf %5, %7 : vector<8x128xf32>
    %c0_6 = arith.constant 0 : index
    %c0_7 = arith.constant 0 : index
    %9 = vector.load %arg7[%c0_6, %c0_7] : memref<8x128xf32, #tpu.memory_space<vmem>>, vector<8x128xf32>
    tpu.vector_store %arg7[%c0_6, %c0_7], %8 {strides = array<i32>} : memref<8x128xf32, #tpu.memory_space<vmem>>, vector<8x128xf32>,
    return
  }
  func.func @transform_1(%arg0: i32, %arg1: i32, %arg2: memref<16xi32, #tpu.memory_space<smem>>) -> (i32, i32) {
    %c0_i32 = arith.constant 0 : i32
    %c0_i32_0 = arith.constant 0 : i32
    return %arg0, %c0_i32 : i32, i32
  }
  func.func @transform_2(%arg0: i32, %arg1: i32, %arg2: memref<16xi32, #tpu.memory_space<smem>>) -> (i32, i32) {
    %c0_i32 = arith.constant 0 : i32
    %c0_i32_0 = arith.constant 0 : i32
    return %c0_i32, %arg1 : i32, i32
  }
  func.func @transform_3(%arg0: i32, %arg1: i32, %arg2: memref<16xi32, #tpu.memory_space<smem>>) -> (i32, i32) {
    %c0_i32 = arith.constant 0 : i32
    %c0_i32_0 = arith.constant 0 : i32
    return %c0_i32, %arg1 : i32, i32
  }
  func.func @transform_4(%arg0: i32, %arg1: i32, %arg2: memref<16xi32, #tpu.memory_space<smem>>) -> (i32, i32) {
    %c0_i32 = arith.constant 0 : i32
    return %arg0, %arg1 : i32, i32
  }
}

</mosaic_0001>

<llo_original>
// kernel: tpu_custom_call.1
$region0: #{tpu_custom_call.1}
  #allocation0 [shape = 'u32[]', space=smem, size = 0x4, offset = 0x4, fixed_abs, tag = 'smem constant byte address 0x4 - core index']
  #allocation1 [shape = 'u32[144,128]{1,0:T(1,128)}', space=vmem, size = 0x12000, scoped, tag = 'internal scratch']
  #allocation2 [shape = 'f32[8,32]{1,0:T(8,128)}', space=vmem, size = 0x1000, scoped, tag = 'scratch operand']
  #allocation3 [shape = 's32[1]{0}', space=sflag, size = 0x4, scoped, tag = 'scratch operand']
  #allocation4 [shape = 's32[1]{0}', space=sflag, size = 0x4, scoped, tag = 'scoped memory for tpu_custom_call.1']
  #allocation5 [shape = 'u8[512]{0}', space=smem, size = 0x200, scoped, tag = 'prefetched SMEM operand 0']
  #allocation9 [shape = 's32[]', space=sflag, size = 0x4, offset = 0, fixed_abs, tag = 'sflag constant byte address 0x0 - dummy sync flag']
  %s0 = inlined_call_operand.vmem [shape: s32[16], index: 0, kind: input, shape index: {}]
  %s1 = inlined_call_operand.vmem [shape: f32[512,32], index: 1, kind: input, shape index: {}]
  %s2 = inlined_call_operand.vmem [shape: f32[16,32], index: 2, kind: input, shape index: {}]
  %s3 = inlined_call_operand.vmem [shape: f32[32,512], index: 3, kind: input, shape index: {}]
  %s4 = inlined_call_operand.vmem [shape: f32[1,512], index: 4, kind: input, shape index: {}]
  %s5 = inlined_call_operand.hbm [shape: f32[16,512], index: 5, kind: output, shape index: {}]
  %s6 = sld [smem:[#allocation0]]
  $region131: #{tpu_custom_call.1} parent=0
    _
  %s8 = ssub.s32 1, %s6
  %s9 = scalar_select 0, %s8, %s6
  %s10 = sshll.u32 %s0, 4
  %s11 = int_to_ptr.vmem [resolvable:$true] %s10
  %13 = dma.vmem_to_smem %s11, 16, [#allocation5], [#allocation4]
  %14 = dma.done [#allocation4], 16
  %15 = sfence
  $region1: #{tpu_custom_call.1} parent=0
    #allocation6 [shape = 'u8[32768]{0}', space=vmem, size = 0x8000, scoped, tag = 'input window, operand 3']
    #allocation7 [shape = 'u8[8192]{0}', space=vmem, size = 0x2000, scoped, tag = 'output window, operand 0']
    #allocation8 [shape = 's32[2]{0}', space=sflag, size = 0x8, scoped, tag = 'scoped memory for tpu_custom_call.1']
    %16 = vsyncpa [#allocation8], 0
    %s17 = scalar_lea.sflag [#allocation8], 1
    %18 = vsyncpa %s17, 0
    loop: start=0, step=1, limit=10
    $region2: #{tpu_custom_call.1} parent=1 // loop_pre_header
      _
    $region3: #{tpu_custom_call.1} parent=1 // loop_header
      %s20 = sphi 0, %s24
      %p21 = scmp.ge.s32.totalorder %s20, 10
      %s27 = sphi 0, %s39
      %s28 = sphi 0, %s35
      %s29 = sphi 0, %s27
      %s30 = sphi 0, %s28
      %s31 = sphi 0, %s29
      %s32 = sphi 0, %s30
      %s42 = sphi 0, %s44
      %s45 = sphi 0, %s42
      %s46 = sphi 0, %s45
      %s62 = sphi 0, %s46
      %s68 = sphi 0, %s70
      %s71 = sphi 0, %s68
      %s72 = sphi 0, %s71
      %s88 = sphi 0, %s72
      %s94 = sphi 0, %s96
      %s97 = sphi 0, %s94
      %s98 = sphi 0, %s97
      %s114 = sphi 0, %s98
      %s122 = sphi 0, %s124
      %s125 = sphi 0, %s122
      %s126 = sphi 0, %s125
      %s142 = sphi 0, %s126
    $region4: #{tpu_custom_call.1} parent=1 // loop_header_branch
      %23 = sbr.rel (%p21) target = $region8
    $region5: #{tpu_custom_call.1} parent=1 // loop_body
      %s25 = ssub.s32 %s20, 1
      %s26 = ssub.s32 %s20, 2
      %s33 = sadd.s32 1, %s28
      %p34 = scmp.ge.s32.totalorder %s33, 4
      %s35 = scalar_select %p34, 0, %s33
      %s36 = sadd.s32 1, %s27
      %s37 = scalar_select %p34, %s36, %s27
      %p38 = scmp.ge.s32.totalorder %s37, 2
      %s39 = scalar_select %p38, 0, %s37
      %s40 = ssub.s32 %s27, %s39
      %p41 = scmp.eq.s32.totalorder %s40, 0
      %s43 = sadd.s32 %s42, 1
      %s44 = scalar_select %p41, %s42, %s43
      %p47 = pneg %p41
      %p48 = scmp.eq.s32.totalorder %s20, 7
      %p49 = por %p47, %p48
      %p50 = scmp.ne.s32.totalorder %s42, %s45
      %p51 = scmp.eq.s32.totalorder %s20, 0
      %p52 = por %p50, %p51
      %p53 = scmp.ne.s32.totalorder %s42, %s45
      %p54 = scmp.eq.s32.totalorder %s25, 7
      %p55 = por %p53, %p54
      %p56 = scmp.ne.s32.totalorder %s45, %s46
      %p57 = scmp.eq.s32.totalorder %s25, 0
      %p58 = por %p56, %p57
      %p59 = scmp.ne.s32.totalorder %s45, %s46
      %p60 = scmp.eq.s32.totalorder %s26, 7
      %p61 = por %p59, %p60
      %p63 = scmp.ne.s32.totalorder %s46, %s62
      %p64 = scmp.eq.s32.totalorder %s26, 0
      %p65 = por %p63, %p64
      %s66 = ssub.s32 %s28, %s35
      %p67 = scmp.eq.s32.totalorder %s66, 0
      %s69 = sadd.s32 %s68, 1
      %s70 = scalar_select %p67, %s68, %s69
      %p73 = pneg %p67
      %p74 = scmp.eq.s32.totalorder %s20, 7
      %p75 = por %p73, %p74
      %p76 = scmp.ne.s32.totalorder %s68, %s71
      %p77 = scmp.eq.s32.totalorder %s20, 0
      %p78 = por %p76, %p77
      %p79 = scmp.ne.s32.totalorder %s68, %s71
      %p80 = scmp.eq.s32.totalorder %s25, 7
      %p81 = por %p79, %p80
      %p82 = scmp.ne.s32.totalorder %s71, %s72
      %p83 = scmp.eq.s32.totalorder %s25, 0
      %p84 = por %p82, %p83
      %p85 = scmp.ne.s32.totalorder %s71, %s72
      %p86 = scmp.eq.s32.totalorder %s26, 7
      %p87 = por %p85, %p86
      %p89 = scmp.ne.s32.totalorder %s72, %s88
      %p90 = scmp.eq.s32.totalorder %s26, 0
      %p91 = por %p89, %p90
      %s92 = ssub.s32 %s28, %s35
      %p93 = scmp.eq.s32.totalorder %s92, 0
      %s95 = sadd.s32 %s94, 1
      %s96 = scalar_select %p93, %s94, %s95
      %p99 = pneg %p93
      %p100 = scmp.eq.s32.totalorder %s20, 7
      %p101 = por %p99, %p100
      %p102 = scmp.ne.s32.totalorder %s94, %s97
      %p103 = scmp.eq.s32.totalorder %s20, 0
      %p104 = por %p102, %p103
      %p105 = scmp.ne.s32.totalorder %s94, %s97
      %p106 = scmp.eq.s32.totalorder %s25, 7
      %p107 = por %p105, %p106
      %p108 = scmp.ne.s32.totalorder %s97, %s98
      %p109 = scmp.eq.s32.totalorder %s25, 0
      %p110 = por %p108, %p109
      %p111 = scmp.ne.s32.totalorder %s97, %s98
      %p112 = scmp.eq.s32.totalorder %s26, 7
      %p113 = por %p111, %p112
      %p115 = scmp.ne.s32.totalorder %s98, %s114
      %p116 = scmp.eq.s32.totalorder %s26, 0
      %p117 = por %p115, %p116
      %s118 = ssub.s32 %s27, %s39
      %s119 = ssub.s32 %s28, %s35
      %s120 = sor.u32 %s118, %s119
      %p121 = scmp.eq.s32.totalorder %s120, 0
      %s123 = sadd.s32 %s122, 1
      %s124 = scalar_select %p121, %s122, %s123
      %p127 = pneg %p121
      %p128 = scmp.eq.s32.totalorder %s20, 7
      %p129 = por %p127, %p128
      %p130 = scmp.ne.s32.totalorder %s122, %s125
      %p131 = scmp.eq.s32.totalorder %s20, 0
      %p132 = por %p130, %p131
      %p133 = scmp.ne.s32.totalorder %s122, %s125
      %p134 = scmp.eq.s32.totalorder %s25, 7
      %p135 = por %p133, %p134
      %p136 = scmp.ne.s32.totalorder %s125, %s126
      %p137 = scmp.eq.s32.totalorder %s25, 0
      %p138 = por %p136, %p137
      %p139 = scmp.ne.s32.totalorder %s125, %s126
      %p140 = scmp.eq.s32.totalorder %s26, 7
      %p141 = por %p139, %p140
      %p143 = scmp.ne.s32.totalorder %s126, %s142
      %p144 = scmp.eq.s32.totalorder %s26, 0
      %p145 = por %p143, %p144
      %p146 = scmp.le.s32.totalorder 1, %s20
      %p147 = scmp.lt.s32.totalorder %s20, 9
      %p148 = pnand %p146, %p147
      %p149 = pneg %p148
      // Predicated region
      $region9: #{tpu_custom_call.1} parent=5 // pred_check
        _
      $region10: #{tpu_custom_call.1} parent=5 // pred_check_branch
        %151 = sbr.rel (%p148) target = $region12
      $region11: #{tpu_custom_call.1} parent=5 // pred_region
        %s152 = ssub.s32 %s20, 1
      $region12: #{tpu_custom_call.1} parent=5 // pred_fallthru
        _
      %p153 = scmp.lt.s32.totalorder %s20, 8
      // Predicated region
      $region13: #{tpu_custom_call.1} parent=5 // pred_check
        %p154 = pneg %p153
      $region14: #{tpu_custom_call.1} parent=5 // pred_check_branch
        %156 = sbr.rel (%p154) target = $region16
      $region15: #{tpu_custom_call.1} parent=5 // pred_region
        // Predicated region
        $region17: #{tpu_custom_call.1} parent=15 // pred_check
          %p157 = pneg %p52
        $region18: #{tpu_custom_call.1} parent=15 // pred_check_branch
          %159 = sbr.rel (%p157) target = $region20
        $region19: #{tpu_custom_call.1} parent=15 // pred_region
          %p160 = scmp.lt.s32.totalorder %s27, 1
          %s161 = scalar_select %p160, %s27, 1
          %s162 = smul.addr %s161, 8
          %s163 = scalar_lea.vmem %s2, %s162
        $region20: #{tpu_custom_call.1} parent=15 // pred_fallthru
          _
        // Predicated region
        $region21: #{tpu_custom_call.1} parent=15 // pred_check
          %p164 = pneg %p78
        $region22: #{tpu_custom_call.1} parent=15 // pred_check_branch
          %166 = sbr.rel (%p164) target = $region24
        $region23: #{tpu_custom_call.1} parent=15 // pred_region
          %s167 = sand.u32 %s68, 1
          %s168 = sand.u32 %s68, 1
          %s169 = smul.addr %s168, 32
          %s170 = scalar_lea.vmem [#allocation6], %s169
          %s171 = smul.addr %s28, 8
          %s172 = scalar_lea.vmem %s3, %s171
          // Predicated region
          $region25: #{tpu_custom_call.1} parent=23 // pred_check
            _
          $region26: #{tpu_custom_call.1} parent=23 // pred_check_branch
            %174 = sbr.rel (0) target = $region28
          $region27: #{tpu_custom_call.1} parent=23 // pred_region
            // Predicated region
            $region29: #{tpu_custom_call.1} parent=27 // pred_check
              _
            $region30: #{tpu_custom_call.1} parent=27 // pred_check_branch
              %176 = sbr.rel (0) target = $region32
            $region31: #{tpu_custom_call.1} parent=27 // pred_region
              // Predicated region
              $region44: #{tpu_custom_call.1} parent=31 // pred_check
                _
              $region45: #{tpu_custom_call.1} parent=31 // pred_check_branch
                %198 = sbr.rel (0) target = $region47
              $region46: #{tpu_custom_call.1} parent=31 // pred_region
                loop: start=0, step=1, limit=1
                $region48: #{tpu_custom_call.1} parent=46 // loop_pre_header
                  _
                $region49: #{tpu_custom_call.1} parent=46 // loop_header
                  %s200 = sphi 0, %s204
                  %p201 = scmp.ge.s32.totalorder %s200, 1
                  %s205 = sphi %s172, %s172
                  %s206 = sphi %s170, %s170
                $region50: #{tpu_custom_call.1} parent=46 // loop_header_branch
                  %203 = sbr.rel (%p201) target = $region54
                $region51: #{tpu_custom_call.1} parent=46 // loop_body
                  %v207 = vld [vmem:[%s205] sm:$0xff]
                  %208 = vst [vmem:[%s206] sm:$0xff] %v207
                  %v209 = vld [vmem:[%s205 + $0x20] sm:$0xff]
                  %210 = vst [vmem:[%s206 + $0x8] sm:$0xff] %v209
                  %v211 = vld [vmem:[%s205 + $0x40] sm:$0xff]
                  %212 = vst [vmem:[%s206 + $0x10] sm:$0xff] %v211
                  %v213 = vld [vmem:[%s205 + $0x60] sm:$0xff]
                  %214 = vst [vmem:[%s206 + $0x18] sm:$0xff] %v213
                $region52: #{tpu_custom_call.1} parent=46 // loop_footer
                  %s204 = sadd.s32 1, %s200
                $region53: #{tpu_custom_call.1} parent=46 // loop_footer_branch
                  %199 = sbr.rel target = $region49
                $region54: #{tpu_custom_call.1} parent=46 // loop_exit
                  _
              $region47: #{tpu_custom_call.1} parent=31 // pred_fallthru
                _
              // Predicated region
              $region55: #{tpu_custom_call.1} parent=31 // pred_check
                _
              $region56: #{tpu_custom_call.1} parent=31 // pred_check_branch
                %216 = sbr.rel target = $region58
              $region57: #{tpu_custom_call.1} parent=31 // pred_region
                _
              $region58: #{tpu_custom_call.1} parent=31 // pred_fallthru
                _
            $region32: #{tpu_custom_call.1} parent=27 // pred_fallthru
              _
            // Predicated region
            $region33: #{tpu_custom_call.1} parent=27 // pred_check
              _
            $region34: #{tpu_custom_call.1} parent=27 // pred_check_branch
              %178 = sbr.rel target = $region36
            $region35: #{tpu_custom_call.1} parent=27 // pred_region
              %s180 = ssub.s32 256, 1
              loop: start=0, step=1, limit=1
              $region37: #{tpu_custom_call.1} parent=35 // loop_pre_header
                _
              $region38: #{tpu_custom_call.1} parent=35 // loop_header
                %s182 = sphi 0, %s186
                %p183 = scmp.ge.s32.totalorder %s182, 1
                %s187 = sphi %s172, %s172
                %s188 = sphi %s170, %s170
              $region39: #{tpu_custom_call.1} parent=35 // loop_header_branch
                %185 = sbr.rel (%p183) target = $region43
              $region40: #{tpu_custom_call.1} parent=35 // loop_body
                %v189 = vld [vmem:[%s187] sm:%s180]
                %190 = vst [vmem:[%s188] sm:%s180] %v189
                %v191 = vld [vmem:[%s187 + $0x20] sm:%s180]
                %192 = vst [vmem:[%s188 + $0x8] sm:%s180] %v191
                %v193 = vld [vmem:[%s187 + $0x40] sm:%s180]
                %194 = vst [vmem:[%s188 + $0x10] sm:%s180] %v193
                %v195 = vld [vmem:[%s187 + $0x60] sm:%s180]
                %196 = vst [vmem:[%s188 + $0x18] sm:%s180] %v195
              $region41: #{tpu_custom_call.1} parent=35 // loop_footer
                %s186 = sadd.s32 1, %s182
              $region42: #{tpu_custom_call.1} parent=35 // loop_footer_branch
                %181 = sbr.rel target = $region38
              $region43: #{tpu_custom_call.1} parent=35 // loop_exit
                _
            $region36: #{tpu_custom_call.1} parent=27 // pred_fallthru
              _
          $region28: #{tpu_custom_call.1} parent=23 // pred_fallthru
            _
          %217 = vnop
        $region24: #{tpu_custom_call.1} parent=15 // pred_fallthru
          _
        // Predicated region
        $region59: #{tpu_custom_call.1} parent=15 // pred_check
          %p218 = pneg %p104
        $region60: #{tpu_custom_call.1} parent=15 // pred_check_branch
          %220 = sbr.rel (%p218) target = $region62
        $region61: #{tpu_custom_call.1} parent=15 // pred_region
          %p221 = scmp.lt.s32.totalorder %s28, 3
          %s222 = scalar_select %p221, %s28, 3
          %s223 = scalar_lea.vmem %s4, %s222
        $region62: #{tpu_custom_call.1} parent=15 // pred_fallthru
          _
      $region16: #{tpu_custom_call.1} parent=5 // pred_fallthru
        _
      %p224 = scmp.le.s32.totalorder 1, %s20
      %p225 = scmp.lt.s32.totalorder %s20, 9
      %p226 = pnand %p224, %p225
      %p227 = pneg %p226
      // Predicated region
      $region63: #{tpu_custom_call.1} parent=5 // pred_check
        _
      $region64: #{tpu_custom_call.1} parent=5 // pred_check_branch
        %229 = sbr.rel (%p226) target = $region66
      $region65: #{tpu_custom_call.1} parent=5 // pred_region
        %s230 = ssub.s32 %s20, 1
        %s231 = sand.u32 %s71, 1
        %s232 = sand.u32 %s71, 1
        %s233 = smul.addr %s232, 32
        %s234 = scalar_lea.vmem [#allocation6], %s233
        // Predicated region
        $region67: #{tpu_custom_call.1} parent=65 // pred_check
          %p235 = pneg %p84
        $region68: #{tpu_custom_call.1} parent=65 // pred_check_branch
          %237 = sbr.rel (%p235) target = $region70
        $region69: #{tpu_custom_call.1} parent=65 // pred_region
          _
        $region70: #{tpu_custom_call.1} parent=65 // pred_fallthru
          _
        %p238 = scmp.lt.s32.totalorder %s29, 1
        %s239 = scalar_select %p238, %s29, 1
        %s240 = smul.addr %s239, 8
        %s241 = scalar_lea.vmem %s2, %s240
        %p242 = pneg %p58
        %p243 = pneg %p55
        %s244 = sand.u32 %s71, 1
        %s245 = sand.u32 %s71, 1
        %s246 = smul.addr %s245, 32
        %s247 = scalar_lea.vmem [#allocation6], %s246
        %p248 = pneg %p84
        %p249 = pneg %p81
        %p250 = scmp.lt.s32.totalorder %s30, 3
        %s251 = scalar_select %p250, %s30, 3
        %s252 = scalar_lea.vmem %s4, %s251
        %p253 = pneg %p110
        %p254 = pneg %p107
        %p255 = pneg %p138
        %p256 = pneg %p135
        %s257 = sand.u32 %s125, 1
        %s258 = scalar_lea.sflag [#allocation8], %s257
        %s259 = sand.u32 %s125, 1
        %s260 = smul.addr %s259, 8
        %s261 = scalar_lea.vmem [#allocation7], %s260
        %p262 = scmp.lt.s32.totalorder %s29, 1
        %s263 = scalar_select %p262, %s29, 1
        %s264 = smul.addr %s263, 8
        %s265 = scalar_lea.vmem %s2, %s264
        %p266 = scmp.lt.s32.totalorder %s30, 3
        %s267 = scalar_select %p266, %s30, 3
        %s268 = scalar_lea.vmem %s4, %s267
        %p269 = scmp.eq.s32.totalorder %s30, 0
        // Predicated region
        $region71: #{tpu_custom_call.1} parent=65 // pred_check
          %p270 = pneg %p269
        $region72: #{tpu_custom_call.1} parent=65 // pred_check_branch
          %272 = sbr.rel (%p270) target = $region74
        $region73: #{tpu_custom_call.1} parent=65 // pred_region
          %s273 = smul.u32 %s29, 8
          loop: start=0, step=1, limit=8
          $region75: #{tpu_custom_call.1} parent=73 // loop_pre_header
            _
          $region76: #{tpu_custom_call.1} parent=73 // loop_header
            %s275 = sphi 0, %s279
            %p276 = scmp.ge.s32.totalorder %s275, 8
          $region77: #{tpu_custom_call.1} parent=73 // loop_header_branch
            %278 = sbr.rel (%p276) target = $region81
          $region78: #{tpu_custom_call.1} parent=73 // loop_body
            %s280 = sadd.s32 %s273, %s275
            %s281 = sld [smem:[#allocation5 + %s280]]
            %s282 = scalar_lea.vmem %s1, %s281
            %s283 = scalar_lea.vmem [#allocation2], %s275
            %p285 = scmp.lt.u32.totalorder 1, 8
            %p286 = pneg %p285
            // Predicated region
            $region82: #{tpu_custom_call.1} parent=78 // pred_check
              _
            $region83: #{tpu_custom_call.1} parent=78 // pred_check_branch
              %288 = sbr.rel (%p285) target = $region85
            $region84: #{tpu_custom_call.1} parent=78 // pred_region
              %s304 = sand.u32 1, 7
              %p305 = scmp.eq.s32.totalorder %s304, 0
              %p306 = pneg %p305
              // Predicated region
              $region97: #{tpu_custom_call.1} parent=84 // pred_check
                _
              $region98: #{tpu_custom_call.1} parent=84 // pred_check_branch
                %308 = sbr.rel (%p305) target = $region100
              $region99: #{tpu_custom_call.1} parent=84 // pred_region
                %s309 = sand.u32 1, 7
                %s310 = ssub.s32 1, %s309
                %s311 = scalar_lea.vmem %s282, %s310
                %s312 = ssub.s32 1, %s309
                %s313 = scalar_lea.vmem %s283, %s312 [#allocation2]
                %s314 = sshll.u32 1, %s309
                %s315 = ssub.s32 %s314, 1
                loop: start=0, step=1, limit=1
                $region101: #{tpu_custom_call.1} parent=99 // loop_pre_header
                  _
                $region102: #{tpu_custom_call.1} parent=99 // loop_header
                  %s317 = sphi 0, %s321
                  %p318 = scmp.ge.s32.totalorder %s317, 1
                  %s322 = sphi %s311, %s311
                  %s323 = sphi %s313, %s313
                $region103: #{tpu_custom_call.1} parent=99 // loop_header_branch
                  %320 = sbr.rel (%p318) target = $region107
                $region104: #{tpu_custom_call.1} parent=99 // loop_body
                  %v324 = vld [vmem:[%s322] sm:%s315]
                  %325 = vst [vmem:[%s323] sm:%s315] %v324
                $region105: #{tpu_custom_call.1} parent=99 // loop_footer
                  %s321 = sadd.s32 1, %s317
                $region106: #{tpu_custom_call.1} parent=99 // loop_footer_branch
                  %316 = sbr.rel target = $region102
                $region107: #{tpu_custom_call.1} parent=99 // loop_exit
                  _
              $region100: #{tpu_custom_call.1} parent=84 // pred_fallthru
                _
            $region85: #{tpu_custom_call.1} parent=78 // pred_fallthru
              _
            // Predicated region
            $region86: #{tpu_custom_call.1} parent=78 // pred_check
              %p289 = pneg %p285
            $region87: #{tpu_custom_call.1} parent=78 // pred_check_branch
              %291 = sbr.rel (%p289) target = $region89
            $region88: #{tpu_custom_call.1} parent=78 // pred_region
              %s292 = sshll.u32 1, 1
              %s293 = ssub.s32 %s292, 1
              loop: start=0, step=1, limit=1
              $region90: #{tpu_custom_call.1} parent=88 // loop_pre_header
                _
              $region91: #{tpu_custom_call.1} parent=88 // loop_header
                %s295 = sphi 0, %s299
                %p296 = scmp.ge.s32.totalorder %s295, 1
                %s300 = sphi %s282, %s282
                %s301 = sphi %s283, %s283
              $region92: #{tpu_custom_call.1} parent=88 // loop_header_branch
                %298 = sbr.rel (%p296) target = $region96
              $region93: #{tpu_custom_call.1} parent=88 // loop_body
                %v302 = vld [vmem:[%s300] sm:%s293]
                %303 = vst [vmem:[%s301] sm:%s293] %v302
              $region94: #{tpu_custom_call.1} parent=88 // loop_footer
                %s299 = sadd.s32 1, %s295
              $region95: #{tpu_custom_call.1} parent=88 // loop_footer_branch
                %294 = sbr.rel target = $region91
              $region96: #{tpu_custom_call.1} parent=88 // loop_exit
                _
            $region89: #{tpu_custom_call.1} parent=78 // pred_fallthru
              _
            // Predicated region
            $region108: #{tpu_custom_call.1} parent=78 // pred_check
              _
            $region109: #{tpu_custom_call.1} parent=78 // pred_check_branch
              %328 = sbr.rel (0) target = $region111
            $region110: #{tpu_custom_call.1} parent=78 // pred_region
              %329 = vsyncadd [#allocation3], 16
            $region111: #{tpu_custom_call.1} parent=78 // pred_fallthru
              _
          $region79: #{tpu_custom_call.1} parent=73 // loop_footer
            %s279 = sadd.s32 1, %s275
          $region80: #{tpu_custom_call.1} parent=73 // loop_footer_branch
            %274 = sbr.rel target = $region76
          $region81: #{tpu_custom_call.1} parent=73 // loop_exit
            _
          loop: start=0, step=1, limit=8
          $region112: #{tpu_custom_call.1} parent=73 // loop_pre_header
            _
          $region113: #{tpu_custom_call.1} parent=73 // loop_header
            %s331 = sphi 0, %s335
            %p332 = scmp.ge.s32.totalorder %s331, 8
          $region114: #{tpu_custom_call.1} parent=73 // loop_header_branch
            %334 = sbr.rel (%p332) target = $region118
          $region115: #{tpu_custom_call.1} parent=73 // loop_body
            %s336 = smul.u32 1, 1
            %s337 = sshll.u32 %s336, 4
            %338 = dma.done [#allocation3], %s337
          $region116: #{tpu_custom_call.1} parent=73 // loop_footer
            %s335 = sadd.s32 1, %s331
          $region117: #{tpu_custom_call.1} parent=73 // loop_footer_branch
            %330 = sbr.rel target = $region113
          $region118: #{tpu_custom_call.1} parent=73 // loop_exit
            _
          %v339 = vld [vmem:[#allocation2] sm:$0xff]
          %v340 = vld [vmem:[%s265] sm:$0xff]
          %v341 = vadd.f32 %v339, %v340
          %vm342 = vcmask 261120
          %343 = vst.msk [vmem:[#allocation2] sm:$0xff] %vm342, %v341
        $region74: #{tpu_custom_call.1} parent=65 // pred_fallthru
          _
        %v344 = vld [vmem:[#allocation2] sm:$0xff]
        %v345 = vld [vmem:[%s234] sm:$0xff]
        %v346 = vld [vmem:[%s234 + $0x8] sm:$0xff]
        %v347 = vld [vmem:[%s234 + $0x10] sm:$0xff]
        %v348 = vld [vmem:[%s234 + $0x18] sm:$0xff]
        %v349 = vld [vmem:[%s268] sm:$0x1]
        %v351 = vlaneseq
        %v352 = vshrl.u32 %v351, 7
        %v353 = vsub.s32 0, %v352
        %v354 = vrot.slane %v349, %v353
        %vm356 = vcmask 261120
        %v358 = vsel %vm356, %v344, 0
        %360 = vmatprep.subr.mxu0 0.0
        %361 = vmatpush1.msra.mxu0 0.0
        %362 = vmatprep.subr.mxu0 0.0
        %363 = vmatpush1.msra.mxu0 0.0
        %364 = vmatprep.subr.mxu0 0.0
        %365 = vmatpush1.msra.mxu0 0.0
        %366 = vmatprep.subr.mxu0 0.0
        %367 = vmatpush1.msra.mxu0 0.0
        %368 = vmatprep.subr.mxu0 0.0
        %369 = vmatpush1.msra.mxu0 0.0
        %370 = vmatprep.subr.mxu0 0.0
        %371 = vmatpush1.msra.mxu0 0.0
        %372 = vmatprep.subr.mxu0 0.0
        %373 = vmatpush1.msra.mxu0 0.0
        %374 = vmatprep.subr.mxu0 0.0
        %375 = vmatpush1.msra.mxu0 0.0
        %376 = vmatprep.subr.mxu0 0.0
        %377 = vmatpush1.msra.mxu0 0.0
        %378 = vmatprep.subr.mxu0 0.0
        %379 = vmatpush1.msra.mxu0 0.0
        %380 = vmatprep.subr.mxu0 0.0
        %381 = vmatpush1.msra.mxu0 0.0
        %382 = vmatprep.subr.mxu0 0.0
        %383 = vmatpush1.msra.mxu0 0.0
        %384 = vmatprep.subr.mxu0 0.0
        %385 = vmatpush1.msra.mxu0 %v348
        %386 = vmatprep.subr.mxu0 0.0
        %387 = vmatpush1.msra.mxu0 %v347
        %388 = vmatprep.subr.mxu0 0.0
        %389 = vmatpush1.msra.mxu0 %v346
        %390 = vmatprep.subr.mxu0 0.0
        %391 = vmatpush1.msra.mxu0 %v345
        %392 = vmatprep.subr.mxu0 0.0
        %393 = vmatpush2.msra.mxu0 0.0
        %394 = vmatprep.subr.mxu0 0.0
        %395 = vmatpush2.msra.mxu0 0.0
        %396 = vmatprep.subr.mxu0 0.0
        %397 = vmatpush2.msra.mxu0 0.0
        %398 = vmatprep.subr.mxu0 0.0
        %399 = vmatpush2.msra.mxu0 0.0
        %400 = vmatprep.subr.mxu0 0.0
        %401 = vmatpush2.msra.mxu0 0.0
        %402 = vmatprep.subr.mxu0 0.0
        %403 = vmatpush2.msra.mxu0 0.0
        %404 = vmatprep.subr.mxu0 0.0
        %405 = vmatpush2.msra.mxu0 0.0
        %406 = vmatprep.subr.mxu0 0.0
        %407 = vmatpush2.msra.mxu0 0.0
        %408 = vmatprep.subr.mxu0 0.0
        %409 = vmatpush2.msra.mxu0 0.0
        %410 = vmatprep.subr.mxu0 0.0
        %411 = vmatpush2.msra.mxu0 0.0
        %412 = vmatprep.subr.mxu0 0.0
        %413 = vmatpush2.msra.mxu0 0.0
        %414 = vmatprep.subr.mxu0 0.0
        %415 = vmatpush2.msra.mxu0 0.0
        %416 = vmatprep.subr.mxu0 0.0
        %417 = vmatpush2.msra.mxu0 0.0
        %418 = vmatprep.subr.mxu0 0.0
        %419 = vmatpush2.msra.mxu0 0.0
        %420 = vmatprep.subr.mxu0 0.0
        %421 = vmatpush2.msra.mxu0 0.0
        %422 = vmatprep.subr.mxu0 0.0
        %423 = vmatpush2.msra.mxu0 0.0
        %424 = vmatprep.mubr.f32.mxu0 0.0
        %425 = vmatmul.mubr.f32.gmra.mxu0 %v358
        %v426 = vpop.f32.mrf.mxu0
        %v427 = vadd.f32 %v354, %v426
        %v428 = vpop.f32.mrf.mxu0
        %429 = vdwg.mxu0
        %430 = vst [vmem:[%s261] sm:$0xff] %v427
        %s431 = sand.u32 %s125, 1
        %s432 = scalar_lea.sflag [#allocation8], %s431
        %s433 = sand.u32 %s125, 1
        %s434 = smul.addr %s433, 8
        %s435 = scalar_lea.vmem [#allocation7], %s434
        // Predicated region
        $region119: #{tpu_custom_call.1} parent=65 // pred_check
          %p436 = pneg %p135
        $region120: #{tpu_custom_call.1} parent=65 // pred_check_branch
          %438 = sbr.rel (%p436) target = $region122
        $region121: #{tpu_custom_call.1} parent=65 // pred_region
          %s440 = ssub.s32 128, 128
          %441 = vsyncadd %s432, %s440
          %s442 = smul.addr %s29, 4
          %s443 = sadd.s32 %s30, %s442
          %s444 = smul.addr %s443, 128
          %s445 = scalar_lea.hbm %s5, %s444
          %s447 = sshll.u32 %s435, 4
          %s448 = int_to_ptr.vmem [resolvable:$true] %s447
          %450 = dma.vmem_to_hbm [thread:$0]  %s448, 128, %s445, %s432
        $region122: #{tpu_custom_call.1} parent=65 // pred_fallthru
          _
      $region66: #{tpu_custom_call.1} parent=5 // pred_fallthru
        _
      %p451 = scmp.le.s32.totalorder 2, %s20
      // Predicated region
      $region123: #{tpu_custom_call.1} parent=5 // pred_check
        %p452 = pneg %p451
      $region124: #{tpu_custom_call.1} parent=5 // pred_check_branch
        %454 = sbr.rel (%p452) target = $region126
      $region125: #{tpu_custom_call.1} parent=5 // pred_region
        %s455 = ssub.s32 %s20, 2
        // Predicated region
        $region127: #{tpu_custom_call.1} parent=125 // pred_check
          %p456 = pneg %p141
        $region128: #{tpu_custom_call.1} parent=125 // pred_check_branch
          %458 = sbr.rel (%p456) target = $region130
        $region129: #{tpu_custom_call.1} parent=125 // pred_region
          %s459 = sand.u32 %s126, 1
          %s460 = scalar_lea.sflag [#allocation8], %s459
          %s461 = sand.u32 %s126, 1
          %s462 = smul.addr %s461, 8
          %s463 = scalar_lea.vmem [#allocation7], %s462
          %464 = dma.done %s460, 128
        $region130: #{tpu_custom_call.1} parent=125 // pred_fallthru
          _
      $region126: #{tpu_custom_call.1} parent=5 // pred_fallthru
        _
    $region6: #{tpu_custom_call.1} parent=1 // loop_footer
      %s24 = sadd.s32 1, %s20
    $region7: #{tpu_custom_call.1} parent=1 // loop_footer_branch
      %19 = sbr.rel target = $region3
    $region8: #{tpu_custom_call.1} parent=1 // loop_exit
      _
    %465 = vsyncpa [#allocation8], 1
    %s466 = scalar_lea.sflag [#allocation8], 1
    %467 = vsyncpa %s466, 1
  %468 = vsyncmov [#allocation3]
  %s469 = vpop.sfrf %468
  %p470 = scmp.eq.s32.totalorder %s469, 0
  %p471 = pneg %p470
  %473 = shalt.err (%p471)

</llo_original>
